<compile_context>
chip_gen: v5e
topology: v5e:2x2
jax: 0.10.0
libtpu: 0.0.40
codegen_flags: <defaults>
</compile_context>

<pallas_src>
import functools

import jax
import jax.numpy as jnp
from jax.experimental import pallas as pl
from jax.experimental.pallas import tpu as pltpu

EPS = 1e-5


# ----------------------------------------------------------------------------
# Kernels
# ----------------------------------------------------------------------------
def _assemble_and_matmul(x_b, wb_ref, y_ref, stats_ref, lhs_ref, *, bt, h, wc):
    """Build the fused conv operand in VMEM scratch and do one MXU matmul.

    x_b       : (bt, h, wc)            bf16  activation block (post pre-BN/ReLU)
    wb_ref    : (3*wc, wc_out)         bf16  banded tap weights (resident)
    y_ref     : (bt, h, wc_out)        bf16  raw conv output (pre-BN)
    stats_ref : (1, 2, wc_out)         f32   per-lane [sum, sum_sq] block partials
    lhs_ref   : (bt, h, 3*wc)          bf16  scratch: fused-contraction operand
    """
    zero_row = jnp.zeros((bt, 1, wc), lhs_ref.dtype)

    # Band ky = 0 reads image row y-1 (zero at the top row of each image).
    lhs_ref[:, 0:1, 0 * wc:1 * wc] = zero_row
    lhs_ref[:, 1:h, 0 * wc:1 * wc] = x_b[:, 0:h - 1, :]
    # Band ky = 1 reads image row y.
    lhs_ref[:, :, 1 * wc:2 * wc] = x_b
    # Band ky = 2 reads image row y+1 (zero at the bottom row of each image).
    lhs_ref[:, 0:h - 1, 2 * wc:3 * wc] = x_b[:, 1:h, :]
    lhs_ref[:, h - 1:h, 2 * wc:3 * wc] = zero_row

    wc_out = wb_ref.shape[1]
    lhs2d = lhs_ref[...].reshape(bt * h, 3 * wc)
    # One MXU matmul with M = bt*h replaces the nine per-tap matmuls.
    acc = jnp.dot(lhs2d, wb_ref[...], preferred_element_type=jnp.float32)  # (bt*h, wc_out)

    y_ref[...] = acc.reshape(bt, h, wc_out).astype(y_ref.dtype)

    # One-pass BatchNorm partial statistics for the whole block (per lane);
    # the tiny per-channel reduction across blocks happens in plain JAX.
    stats_ref[0, 0:1, :] = jnp.sum(acc, axis=0, keepdims=True)
    stats_ref[0, 1:2, :] = jnp.sum(acc * acc, axis=0, keepdims=True)


def _conv_stats_kernel_raw(x_ref, wb_ref, y_ref, stats_ref, lhs_ref, *, bt, h, wc):
    """Conv + stats, no preceding BN/ReLU (first stage)."""
    _assemble_and_matmul(x_ref[...], wb_ref, y_ref, stats_ref, lhs_ref,
                         bt=bt, h=h, wc=wc)


def _conv_stats_kernel_pre(x_ref, wb_ref, scale_ref, shift_ref, y_ref, stats_ref,
                           lhs_ref, *, bt, h, wc):
    """Previous-stage BN (affine form) + ReLU fused with conv + stats."""
    x = x_ref[...].astype(jnp.float32)
    x = jnp.maximum(x * scale_ref[...] + shift_ref[...], 0.0).astype(jnp.bfloat16)
    _assemble_and_matmul(x, wb_ref, y_ref, stats_ref, lhs_ref, bt=bt, h=h, wc=wc)


def _bn_relu_kernel(y_ref, scale_ref, shift_ref, o_ref):
    """Final BatchNorm (affine form) + ReLU on lane-dense (bt, h, w*cout) blocks."""
    y = y_ref[...].astype(jnp.float32)
    o_ref[...] = jnp.maximum(y * scale_ref[...] + shift_ref[...], 0.0)


# ----------------------------------------------------------------------------
# Wrappers
# ----------------------------------------------------------------------------
def _pick_bt(n, h, target_m=256):
    """Largest divisor of n such that Bt*h <= target_m (M of the MXU matmul)."""
    best = 1
    for d in range(1, n + 1):
        if n % d == 0 and d * h <= target_m:
            best = d
    return best


def _banded_weights(w_oihw, w):
    """Fold 3x3 taps + column shifts into one (3*W*Cin, W*Cout) matrix.

    Horizontal zero-padding is folded in here: taps that fall off the image
    simply get zero weight, so the LHS needs no column pad and band offsets
    are ky * (W*Cin) (vreg-aligned when W*Cin is a multiple of 128).

        wb[ky*W*Cin + j*Cin + ci, x*Cout + co] = W[co, ci, ky, j - x + 1]
        for 0 <= j - x + 1 <= 2, else 0.
    """
    cout, cin, _, _ = w_oihw.shape
    # shift[kx, j, x] = 1 iff j == x + kx - 1
    shift = jnp.stack(
        [jnp.eye(w, w, k=1 - kx, dtype=jnp.float32) for kx in range(3)], axis=0)  # (3, w, w)
    full = jnp.einsum('kjx,oiyk->yjixo', shift, w_oihw.astype(jnp.float32))       # (3, w, cin, w, cout)
    return full.reshape(3 * w * cin, w * cout).astype(jnp.bfloat16)


def _conv_stats(x_lane, wb, scale_prev, shift_prev, *, bt, h, w, cin, cout):
    n = x_lane.shape[0]
    nblk = n // bt
    wc_in = w * cin
    wc_out = w * cout
    k3 = 3 * wc_in
    apply_pre = scale_prev is not None

    if apply_pre:
        kernel = functools.partial(_conv_stats_kernel_pre, bt=bt, h=h, wc=wc_in)
        in_specs = [
            pl.BlockSpec((bt, h, wc_in), lambda i: (i, 0, 0)),   # activation block
            pl.BlockSpec((k3, wc_out), lambda i: (0, 0)),        # banded weights (resident)
            pl.BlockSpec((1, wc_in), lambda i: (0, 0)),          # prev BN scale
            pl.BlockSpec((1, wc_in), lambda i: (0, 0)),          # prev BN shift
        ]
        operands = (x_lane, wb, scale_prev, shift_prev)
    else:
        kernel = functools.partial(_conv_stats_kernel_raw, bt=bt, h=h, wc=wc_in)
        in_specs = [
            pl.BlockSpec((bt, h, wc_in), lambda i: (i, 0, 0)),
            pl.BlockSpec((k3, wc_out), lambda i: (0, 0)),
        ]
        operands = (x_lane, wb)

    return pl.pallas_call(
        kernel,
        out_shape=(jax.ShapeDtypeStruct((n, h, wc_out), jnp.bfloat16),
                   jax.ShapeDtypeStruct((nblk, 2, wc_out), jnp.float32)),
        grid_spec=pltpu.PrefetchScalarGridSpec(
            num_scalar_prefetch=0,
            grid=(nblk,),
            in_specs=in_specs,
            out_specs=[
                pl.BlockSpec((bt, h, wc_out), lambda i: (i, 0, 0)),   # raw conv out
                pl.BlockSpec((1, 2, wc_out), lambda i: (i, 0, 0)),    # stats partials
            ],
            scratch_shapes=[pltpu.VMEM((bt, h, k3), jnp.bfloat16)],
        ),
        compiler_params=pltpu.CompilerParams(
            dimension_semantics=("parallel",),
            # Blocks here are tiny; explicit limit keeps us well below even
            # v7x's 64 MiB physical VMEM with double buffering.
            vmem_limit_bytes=32 * 1024 * 1024,
        ),
    )(*operands)


def _bn_affine(stats, gamma, beta, count, w, cout):
    """Reduce per-lane block partials to per-channel (scale, shift), lane-broadcast."""
    s = stats.reshape(stats.shape[0], 2, w, cout)
    ssum = jnp.sum(s[:, 0], axis=(0, 1))                      # (cout,)
    ssq = jnp.sum(s[:, 1], axis=(0, 1))                       # (cout,)
    mean = ssum / count
    var = jnp.maximum(ssq / count - mean * mean, 0.0)         # biased (training-mode) variance
    inv_std = jax.lax.rsqrt(var + EPS)
    scale = gamma.astype(jnp.float32) * inv_std
    shift = beta.astype(jnp.float32) - mean * scale
    return (jnp.tile(scale, w).reshape(1, w * cout),
            jnp.tile(shift, w).reshape(1, w * cout))


def _bn_relu(y_raw, scale_l, shift_l, *, bt, h, wc):
    n = y_raw.shape[0]
    nblk = n // bt
    return pl.pallas_call(
        _bn_relu_kernel,
        # f32 output to match the PyTorch module's float activations; switch
        # to bf16 if downstream tolerates it (halves the HBM writeback).
        out_shape=jax.ShapeDtypeStruct((n, h, wc), jnp.float32),
        grid_spec=pltpu.PrefetchScalarGridSpec(
            num_scalar_prefetch=0,
            grid=(nblk,),
            in_specs=[
                pl.BlockSpec((bt, h, wc), lambda i: (i, 0, 0)),
                pl.BlockSpec((1, wc), lambda i: (0, 0)),
                pl.BlockSpec((1, wc), lambda i: (0, 0)),
            ],
            out_specs=pl.BlockSpec((bt, h, wc), lambda i: (i, 0, 0)),
        ),
        compiler_params=pltpu.CompilerParams(
            dimension_semantics=("parallel",),
            vmem_limit_bytes=32 * 1024 * 1024,
        ),
    )(y_raw, scale_l, shift_l)


@jax.jit
def double_conv(x_nchw, w1, g1, b1, w2, g2, b2):
    """Forward pass of DoubleConv. Input/output are NCHW like PyTorch."""
    n, cin, h, w = x_nchw.shape
    cout = w1.shape[0]
    count = n * h * w
    bt = _pick_bt(n, h)                               # images per grid step

    # NCHW -> lane-dense (N, H, W*Cin) bf16.
    x_lane = jnp.transpose(x_nchw, (0, 2, 3, 1)).reshape(n, h, w * cin).astype(jnp.bfloat16)

    wb1 = _banded_weights(w1, w)                      # (3*W*Cin,  W*Cout) bf16
    wb2 = _banded_weights(w2, w)                      # (3*W*Cout, W*Cout) bf16

    # Pass 1: conv1 + BN1 partial stats.
    y1_raw, st1 = _conv_stats(x_lane, wb1, None, None,
                              bt=bt, h=h, w=w, cin=cin, cout=cout)
    scale1, shift1 = _bn_affine(st1, g1, b1, count, w, cout)

    # Pass 2: BN1+ReLU fused with conv2 + BN2 partial stats (y1 stays bf16).
    y2_raw, st2 = _conv_stats(y1_raw, wb2, scale1, shift1,
                              bt=bt, h=h, w=w, cin=cout, cout=cout)
    scale2, shift2 = _bn_affine(st2, g2, b2, count, w, cout)

    # Pass 3: BN2 + ReLU.
    out_lane = _bn_relu(y2_raw, scale2, shift2, bt=bt, h=h, wc=w * cout)

    return jnp.transpose(out_lane.reshape(n, h, w, cout), (0, 3, 1, 2))


# ----------------------------------------------------------------------------
# Pure-JAX reference (XLA conv, f32) for correctness checking.
# ----------------------------------------------------------------------------
def _reference_double_conv(x_nchw, w1, g1, b1, w2, g2, b2):
    def stage(x, w, g, b):
        y = jax.lax.conv_general_dilated(
            x, w, window_strides=(1, 1), padding=((1, 1), (1, 1)),
            dimension_numbers=("NCHW", "OIHW", "NCHW"))
        mean = y.mean(axis=(0, 2, 3), keepdims=True)
        var = ((y - mean) ** 2).mean(axis=(0, 2, 3), keepdims=True)
        y = (y - mean) * jax.lax.rsqrt(var + EPS)
        y = y * g.reshape(1, -1, 1, 1) + b.reshape(1, -1, 1, 1)
        return jnp.maximum(y, 0.0)
    return stage(stage(x_nchw, w1, g1, b1), w2, g2, b2)


if __name__ == "__main__":
    # Small shapes consistent with DoubleConv(in_channels=4, out_channels=8).
    N, C_IN, C_OUT, H, W = 2, 4, 8, 16, 16

    key = jax.random.PRNGKey(0)
    kx, kw1, kw2, kg1, kb1, kg2, kb2 = jax.random.split(key, 7)

    x = jax.random.normal(kx, (N, C_IN, H, W), dtype=jnp.float32)
    w1 = 0.2 * jax.random.normal(kw1, (C_OUT, C_IN, 3, 3), dtype=jnp.float32)
    w2 = 0.2 * jax.random.normal(kw2, (C_OUT, C_OUT, 3, 3), dtype=jnp.float32)
    g1 = 1.0 + 0.1 * jax.random.normal(kg1, (C_OUT,), dtype=jnp.float32)
    b1 = 0.1 * jax.random.normal(kb1, (C_OUT,), dtype=jnp.float32)
    g2 = 1.0 + 0.1 * jax.random.normal(kg2, (C_OUT,), dtype=jnp.float32)
    b2 = 0.1 * jax.random.normal(kb2, (C_OUT,), dtype=jnp.float32)

    out = double_conv(x, w1, g1, b1, w2, g2, b2)
    out = jax.block_until_ready(out)
    assert out.shape == (N, C_OUT, H, W), out.shape

    ref = _reference_double_conv(x, w1, g1, b1, w2, g2, b2)
    ref = jax.block_until_ready(ref)
    max_err = float(jnp.max(jnp.abs(out - ref)))
    # bf16 activations/weights on the MXU vs an all-f32 reference.
    assert max_err < 5e-2, f"mismatch vs reference: {max_err}"

    print("KERNEL_OK")
</pallas_src>

<mosaic_0001>
module attributes {stable_mosaic.version = 11 : i64} {
  func.func @_conv_stats_kernel_raw(%arg0: i32, %arg1: memref<2x16x64xbf16, #tpu.memory_space<vmem>>, %arg2: memref<192x128xbf16, #tpu.memory_space<vmem>>, %arg3: memref<2x16x128xbf16, #tpu.memory_space<vmem>>, %arg4: memref<1x2x128xf32, #tpu.memory_space<vmem>>, %arg5: memref<2x16x192xbf16, #tpu.memory_space<vmem>>) attributes {dimension_semantics = [#tpu.dimension_semantics<parallel>], iteration_bounds = array<i64: 1>, scalar_prefetch = 0 : i64, scratch_operands = 1 : i64, tpu.core_type = #tpu.core_type<tc>, window_params = [{transform_indices = @transform_0, window_bounds = array<i64: 2, 16, 64>}, {pipeline_mode = #tpu.pipeline_mode<synchronous>, transform_indices = @transform_1, window_bounds = array<i64: 192, 128>}, {transform_indices = @transform_2, window_bounds = array<i64: 2, 16, 128>}, {transform_indices = @transform_3, window_bounds = array<i64: 1, 2, 128>}]} {
    %c0 = arith.constant 0 : index
    %c0_0 = arith.constant 0 : index
    %c0_1 = arith.constant 0 : index
    %0 = vector.load %arg1[%c0, %c0_0, %c0_1] : memref<2x16x64xbf16, #tpu.memory_space<vmem>>, vector<2x16x64xbf16>
    %cst = arith.constant 0.000000e+00 : bf16
    %1 = vector.broadcast %cst : bf16 to vector<2x1x64xbf16>
    %c0_2 = arith.constant 0 : index
    %c0_3 = arith.constant 0 : index
    %c0_4 = arith.constant 0 : index
    %2 = vector.load %arg5[%c0_2, %c0_3, %c0_4] : memref<2x16x192xbf16, #tpu.memory_space<vmem>>, vector<2x1x64xbf16>
    tpu.vector_store %arg5[%c0_2, %c0_3, %c0_4], %1 {strides = array<i32>} : memref<2x16x192xbf16, #tpu.memory_space<vmem>>, vector<2x1x64xbf16>,
    %3 = vector.extract_strided_slice %0 {offsets = [0, 0, 0], sizes = [2, 15, 64], strides = [1, 1, 1]} : vector<2x16x64xbf16> to vector<2x15x64xbf16>
    %c0_5 = arith.constant 0 : index
    %c1 = arith.constant 1 : index
    %c0_6 = arith.constant 0 : index
    %4 = vector.load %arg5[%c0_5, %c1, %c0_6] : memref<2x16x192xbf16, #tpu.memory_space<vmem>>, vector<2x15x64xbf16>
    tpu.vector_store %arg5[%c0_5, %c1, %c0_6], %3 {strides = array<i32>} : memref<2x16x192xbf16, #tpu.memory_space<vmem>>, vector<2x15x64xbf16>,
    %c0_7 = arith.constant 0 : index
    %c0_8 = arith.constant 0 : index
    %c64 = arith.constant 64 : index
    %5 = vector.load %arg5[%c0_7, %c0_8, %c64] : memref<2x16x192xbf16, #tpu.memory_space<vmem>>, vector<2x16x64xbf16>
    tpu.vector_store %arg5[%c0_7, %c0_8, %c64], %0 {strides = array<i32>} : memref<2x16x192xbf16, #tpu.memory_space<vmem>>, vector<2x16x64xbf16>,
    %6 = vector.extract_strided_slice %0 {offsets = [0, 1, 0], sizes = [2, 15, 64], strides = [1, 1, 1]} : vector<2x16x64xbf16> to vector<2x15x64xbf16>
    %c0_9 = arith.constant 0 : index
    %c0_10 = arith.constant 0 : index
    %c128 = arith.constant 128 : index
    %7 = vector.load %arg5[%c0_9, %c0_10, %c128] : memref<2x16x192xbf16, #tpu.memory_space<vmem>>, vector<2x15x64xbf16>
    tpu.vector_store %arg5[%c0_9, %c0_10, %c128], %6 {strides = array<i32>} : memref<2x16x192xbf16, #tpu.memory_space<vmem>>, vector<2x15x64xbf16>,
    %c0_11 = arith.constant 0 : index
    %c15 = arith.constant 15 : index
    %c128_12 = arith.constant 128 : index
    %8 = vector.load %arg5[%c0_11, %c15, %c128_12] : memref<2x16x192xbf16, #tpu.memory_space<vmem>>, vector<2x1x64xbf16>
    tpu.vector_store %arg5[%c0_11, %c15, %c128_12], %1 {strides = array<i32>} : memref<2x16x192xbf16, #tpu.memory_space<vmem>>, vector<2x1x64xbf16>,
    %c0_13 = arith.constant 0 : index
    %c0_14 = arith.constant 0 : index
    %c0_15 = arith.constant 0 : index
    %9 = vector.load %arg5[%c0_13, %c0_14, %c0_15] : memref<2x16x192xbf16, #tpu.memory_space<vmem>>, vector<2x16x192xbf16>
    %10 = vector.shape_cast %9 : vector<2x16x192xbf16> to vector<32x192xbf16>
    %c0_16 = arith.constant 0 : index
    %c0_17 = arith.constant 0 : index
    %11 = vector.load %arg2[%c0_16, %c0_17] : memref<192x128xbf16, #tpu.memory_space<vmem>>, vector<192x128xbf16>
    %cst_18 = arith.constant dense<0.000000e+00> : vector<32x128xf32>
    %12 = tpu.matmul %10, %11, %cst_18 {dimension_numbers = #tpu.dot_dimension_numbers<[1], [0], [0], [1], [0, 0, 1, 1], [], []>} : vector<32x192xbf16>, vector<192x128xbf16>, vector<32x128xf32> -> vector<32x128xf32>
    %13 = vector.shape_cast %12 : vector<32x128xf32> to vector<2x16x128xf32>
    %14 = arith.truncf %13 : vector<2x16x128xf32> to vector<2x16x128xbf16>
    %c0_19 = arith.constant 0 : index
    %c0_20 = arith.constant 0 : index
    %c0_21 = arith.constant 0 : index
    %15 = vector.load %arg3[%c0_19, %c0_20, %c0_21] : memref<2x16x128xbf16, #tpu.memory_space<vmem>>, vector<2x16x128xbf16>
    tpu.vector_store %arg3[%c0_19, %c0_20, %c0_21], %14 {strides = array<i32>} : memref<2x16x128xbf16, #tpu.memory_space<vmem>>, vector<2x16x128xbf16>,
    %cst_22 = arith.constant dense<0.000000e+00> : vector<128xf32>
    %16 = vector.multi_reduction <add>, %12, %cst_22 [0] : vector<32x128xf32> to vector<128xf32>
    %17 = vector.shape_cast %16 : vector<128xf32> to vector<1x128xf32>
    %c0_23 = arith.constant 0 : index
    %c0_24 = arith.constant 0 : index
    %c0_25 = arith.constant 0 : index
    %18 = vector.load %arg4[%c0_23, %c0_24, %c0_25] : memref<1x2x128xf32, #tpu.memory_space<vmem>>, vector<1x1x128xf32>
    %19 = vector.shape_cast %18 : vector<1x1x128xf32> to vector<1x128xf32>
    %20 = vector.shape_cast %17 : vector<1x128xf32> to vector<1x1x128xf32>
    tpu.vector_store %arg4[%c0_23, %c0_24, %c0_25], %20 {strides = array<i32>} : memref<1x2x128xf32, #tpu.memory_space<vmem>>, vector<1x1x128xf32>,
    %21 = arith.mulf %12, %12 : vector<32x128xf32>
    %cst_26 = arith.constant dense<0.000000e+00> : vector<128xf32>
    %22 = vector.multi_reduction <add>, %21, %cst_26 [0] : vector<32x128xf32> to vector<128xf32>
    %23 = vector.shape_cast %22 : vector<128xf32> to vector<1x128xf32>
    %c0_27 = arith.constant 0 : index
    %c1_28 = arith.constant 1 : index
    %c0_29 = arith.constant 0 : index
    %24 = vector.load %arg4[%c0_27, %c1_28, %c0_29] : memref<1x2x128xf32, #tpu.memory_space<vmem>>, vector<1x1x128xf32>
    %25 = vector.shape_cast %24 : vector<1x1x128xf32> to vector<1x128xf32>
    %26 = vector.shape_cast %23 : vector<1x128xf32> to vector<1x1x128xf32>
    tpu.vector_store %arg4[%c0_27, %c1_28, %c0_29], %26 {strides = array<i32>} : memref<1x2x128xf32, #tpu.memory_space<vmem>>, vector<1x1x128xf32>,
    return
  }
  func.func @transform_0(%arg0: i32) -> (i32, i32, i32) {
    %c0_i32 = arith.constant 0 : i32
    %c0_i32_0 = arith.constant 0 : i32
    %c0_i32_1 = arith.constant 0 : i32
    return %arg0, %c0_i32, %c0_i32_0 : i32, i32, i32
  }
  func.func @transform_1(%arg0: i32) -> (i32, i32) {
    %c0_i32 = arith.constant 0 : i32
    %c0_i32_0 = arith.constant 0 : i32
    %c0_i32_1 = arith.constant 0 : i32
    return %c0_i32, %c0_i32_0 : i32, i32
  }
  func.func @transform_2(%arg0: i32) -> (i32, i32, i32) {
    %c0_i32 = arith.constant 0 : i32
    %c0_i32_0 = arith.constant 0 : i32
    %c0_i32_1 = arith.constant 0 : i32
    return %arg0, %c0_i32, %c0_i32_0 : i32, i32, i32
  }
  func.func @transform_3(%arg0: i32) -> (i32, i32, i32) {
    %c0_i32 = arith.constant 0 : i32
    %c0_i32_0 = arith.constant 0 : i32
    %c0_i32_1 = arith.constant 0 : i32
    return %arg0, %c0_i32, %c0_i32_0 : i32, i32, i32
  }
}

module attributes {stable_mosaic.version = 11 : i64} {
  func.func @_conv_stats_kernel_pre(%arg0: i32, %arg1: memref<2x16x128xbf16, #tpu.memory_space<vmem>>, %arg2: memref<384x128xbf16, #tpu.memory_space<vmem>>, %arg3: memref<1x128xf32, #tpu.memory_space<vmem>>, %arg4: memref<1x128xf32, #tpu.memory_space<vmem>>, %arg5: memref<2x16x128xbf16, #tpu.memory_space<vmem>>, %arg6: memref<1x2x128xf32, #tpu.memory_space<vmem>>, %arg7: memref<2x16x384xbf16, #tpu.memory_space<vmem>>) attributes {dimension_semantics = [#tpu.dimension_semantics<parallel>], iteration_bounds = array<i64: 1>, scalar_prefetch = 0 : i64, scratch_operands = 1 : i64, tpu.core_type = #tpu.core_type<tc>, window_params = [{transform_indices = @transform_0, window_bounds = array<i64: 2, 16, 128>}, {pipeline_mode = #tpu.pipeline_mode<synchronous>, transform_indices = @transform_1, window_bounds = array<i64: 384, 128>}, {pipeline_mode = #tpu.pipeline_mode<synchronous>, transform_indices = @transform_2, window_bounds = array<i64: 1, 128>}, {pipeline_mode = #tpu.pipeline_mode<synchronous>, transform_indices = @transform_3, window_bounds = array<i64: 1, 128>}, {transform_indices = @transform_4, window_bounds = array<i64: 2, 16, 128>}, {transform_indices = @transform_5, window_bounds = array<i64: 1, 2, 128>}]} {
    %c0 = arith.constant 0 : index
    %c0_0 = arith.constant 0 : index
    %c0_1 = arith.constant 0 : index
    %0 = vector.load %arg1[%c0, %c0_0, %c0_1] : memref<2x16x128xbf16, #tpu.memory_space<vmem>>, vector<2x16x128xbf16>
    %1 = arith.extf %0 : vector<2x16x128xbf16> to vector<2x16x128xf32>
    %c0_2 = arith.constant 0 : index
    %c0_3 = arith.constant 0 : index
    %2 = vector.load %arg3[%c0_2, %c0_3] : memref<1x128xf32, #tpu.memory_space<vmem>>, vector<1x128xf32>
    %3 = vector.shape_cast %2 : vector<1x128xf32> to vector<1x1x128xf32>
    %4 = vector.broadcast %3 : vector<1x1x128xf32> to vector<2x16x128xf32>
    %5 = arith.mulf %1, %4 : vector<2x16x128xf32>
    %c0_4 = arith.constant 0 : index
    %c0_5 = arith.constant 0 : index
    %6 = vector.load %arg4[%c0_4, %c0_5] : memref<1x128xf32, #tpu.memory_space<vmem>>, vector<1x128xf32>
    %7 = vector.shape_cast %6 : vector<1x128xf32> to vector<1x1x128xf32>
    %8 = vector.broadcast %7 : vector<1x1x128xf32> to vector<2x16x128xf32>
    %9 = arith.addf %5, %8 : vector<2x16x128xf32>
    %cst = arith.constant 0.000000e+00 : f32
    %10 = vector.broadcast %cst : f32 to vector<2x16x128xf32>
    %11 = arith.maximumf %9, %10 : vector<2x16x128xf32>
    %12 = arith.truncf %11 : vector<2x16x128xf32> to vector<2x16x128xbf16>
    %cst_6 = arith.constant 0.000000e+00 : bf16
    %13 = vector.broadcast %cst_6 : bf16 to vector<2x1x128xbf16>
    %c0_7 = arith.constant 0 : index
    %c0_8 = arith.constant 0 : index
    %c0_9 = arith.constant 0 : index
    %14 = vector.load %arg7[%c0_7, %c0_8, %c0_9] : memref<2x16x384xbf16, #tpu.memory_space<vmem>>, vector<2x1x128xbf16>
    tpu.vector_store %arg7[%c0_7, %c0_8, %c0_9], %13 {strides = array<i32>} : memref<2x16x384xbf16, #tpu.memory_space<vmem>>, vector<2x1x128xbf16>,
    %15 = vector.extract_strided_slice %12 {offsets = [0, 0, 0], sizes = [2, 15, 128], strides = [1, 1, 1]} : vector<2x16x128xbf16> to vector<2x15x128xbf16>
    %c0_10 = arith.constant 0 : index
    %c1 = arith.constant 1 : index
    %c0_11 = arith.constant 0 : index
    %16 = vector.load %arg7[%c0_10, %c1, %c0_11] : memref<2x16x384xbf16, #tpu.memory_space<vmem>>, vector<2x15x128xbf16>
    tpu.vector_store %arg7[%c0_10, %c1, %c0_11], %15 {strides = array<i32>} : memref<2x16x384xbf16, #tpu.memory_space<vmem>>, vector<2x15x128xbf16>,
    %c0_12 = arith.constant 0 : index
    %c0_13 = arith.constant 0 : index
    %c128 = arith.constant 128 : index
    %17 = vector.load %arg7[%c0_12, %c0_13, %c128] : memref<2x16x384xbf16, #tpu.memory_space<vmem>>, vector<2x16x128xbf16>
    tpu.vector_store %arg7[%c0_12, %c0_13, %c128], %12 {strides = array<i32>} : memref<2x16x384xbf16, #tpu.memory_space<vmem>>, vector<2x16x128xbf16>,
    %18 = vector.extract_strided_slice %12 {offsets = [0, 1, 0], sizes = [2, 15, 128], strides = [1, 1, 1]} : vector<2x16x128xbf16> to vector<2x15x128xbf16>
    %c0_14 = arith.constant 0 : index
    %c0_15 = arith.constant 0 : index
    %c256 = arith.constant 256 : index
    %19 = vector.load %arg7[%c0_14, %c0_15, %c256] : memref<2x16x384xbf16, #tpu.memory_space<vmem>>, vector<2x15x128xbf16>
    tpu.vector_store %arg7[%c0_14, %c0_15, %c256], %18 {strides = array<i32>} : memref<2x16x384xbf16, #tpu.memory_space<vmem>>, vector<2x15x128xbf16>,
    %c0_16 = arith.constant 0 : index
    %c15 = arith.constant 15 : index
    %c256_17 = arith.constant 256 : index
    %20 = vector.load %arg7[%c0_16, %c15, %c256_17] : memref<2x16x384xbf16, #tpu.memory_space<vmem>>, vector<2x1x128xbf16>
    tpu.vector_store %arg7[%c0_16, %c15, %c256_17], %13 {strides = array<i32>} : memref<2x16x384xbf16, #tpu.memory_space<vmem>>, vector<2x1x128xbf16>,
    %c0_18 = arith.constant 0 : index
    %c0_19 = arith.constant 0 : index
    %c0_20 = arith.constant 0 : index
    %21 = vector.load %arg7[%c0_18, %c0_19, %c0_20] : memref<2x16x384xbf16, #tpu.memory_space<vmem>>, vector<2x16x384xbf16>
    %22 = vector.shape_cast %21 : vector<2x16x384xbf16> to vector<32x384xbf16>
    %c0_21 = arith.constant 0 : index
    %c0_22 = arith.constant 0 : index
    %23 = vector.load %arg2[%c0_21, %c0_22] : memref<384x128xbf16, #tpu.memory_space<vmem>>, vector<384x128xbf16>
    %cst_23 = arith.constant dense<0.000000e+00> : vector<32x128xf32>
    %24 = tpu.matmul %22, %23, %cst_23 {dimension_numbers = #tpu.dot_dimension_numbers<[1], [0], [0], [1], [0, 0, 1, 1], [], []>} : vector<32x384xbf16>, vector<384x128xbf16>, vector<32x128xf32> -> vector<32x128xf32>
    %25 = vector.shape_cast %24 : vector<32x128xf32> to vector<2x16x128xf32>
    %26 = arith.truncf %25 : vector<2x16x128xf32> to vector<2x16x128xbf16>
    %c0_24 = arith.constant 0 : index
    %c0_25 = arith.constant 0 : index
    %c0_26 = arith.constant 0 : index
    %27 = vector.load %arg5[%c0_24, %c0_25, %c0_26] : memref<2x16x128xbf16, #tpu.memory_space<vmem>>, vector<2x16x128xbf16>
    tpu.vector_store %arg5[%c0_24, %c0_25, %c0_26], %26 {strides = array<i32>} : memref<2x16x128xbf16, #tpu.memory_space<vmem>>, vector<2x16x128xbf16>,
    %cst_27 = arith.constant dense<0.000000e+00> : vector<128xf32>
    %28 = vector.multi_reduction <add>, %24, %cst_27 [0] : vector<32x128xf32> to vector<128xf32>
    %29 = vector.shape_cast %28 : vector<128xf32> to vector<1x128xf32>
    %c0_28 = arith.constant 0 : index
    %c0_29 = arith.constant 0 : index
    %c0_30 = arith.constant 0 : index
    %30 = vector.load %arg6[%c0_28, %c0_29, %c0_30] : memref<1x2x128xf32, #tpu.memory_space<vmem>>, vector<1x1x128xf32>
    %31 = vector.shape_cast %30 : vector<1x1x128xf32> to vector<1x128xf32>
    %32 = vector.shape_cast %29 : vector<1x128xf32> to vector<1x1x128xf32>
    tpu.vector_store %arg6[%c0_28, %c0_29, %c0_30], %32 {strides = array<i32>} : memref<1x2x128xf32, #tpu.memory_space<vmem>>, vector<1x1x128xf32>,
    %33 = arith.mulf %24, %24 : vector<32x128xf32>
    %cst_31 = arith.constant dense<0.000000e+00> : vector<128xf32>
    %34 = vector.multi_reduction <add>, %33, %cst_31 [0] : vector<32x128xf32> to vector<128xf32>
    %35 = vector.shape_cast %34 : vector<128xf32> to vector<1x128xf32>
    %c0_32 = arith.constant 0 : index
    %c1_33 = arith.constant 1 : index
    %c0_34 = arith.constant 0 : index
    %36 = vector.load %arg6[%c0_32, %c1_33, %c0_34] : memref<1x2x128xf32, #tpu.memory_space<vmem>>, vector<1x1x128xf32>
    %37 = vector.shape_cast %36 : vector<1x1x128xf32> to vector<1x128xf32>
    %38 = vector.shape_cast %35 : vector<1x128xf32> to vector<1x1x128xf32>
    tpu.vector_store %arg6[%c0_32, %c1_33, %c0_34], %38 {strides = array<i32>} : memref<1x2x128xf32, #tpu.memory_space<vmem>>, vector<1x1x128xf32>,
    return
  }
  func.func @transform_0(%arg0: i32) -> (i32, i32, i32) {
    %c0_i32 = arith.constant 0 : i32
    %c0_i32_0 = arith.constant 0 : i32
    %c0_i32_1 = arith.constant 0 : i32
    return %arg0, %c0_i32, %c0_i32_0 : i32, i32, i32
  }
  func.func @transform_1(%arg0: i32) -> (i32, i32) {
    %c0_i32 = arith.constant 0 : i32
    %c0_i32_0 = arith.constant 0 : i32
    %c0_i32_1 = arith.constant 0 : i32
    return %c0_i32, %c0_i32_0 : i32, i32
  }
  func.func @transform_2(%arg0: i32) -> (i32, i32) {
    %c0_i32 = arith.constant 0 : i32
    %c0_i32_0 = arith.constant 0 : i32
    %c0_i32_1 = arith.constant 0 : i32
    return %c0_i32, %c0_i32_0 : i32, i32
  }
  func.func @transform_3(%arg0: i32) -> (i32, i32) {
    %c0_i32 = arith.constant 0 : i32
    %c0_i32_0 = arith.constant 0 : i32
    %c0_i32_1 = arith.constant 0 : i32
    return %c0_i32, %c0_i32_0 : i32, i32
  }
  func.func @transform_4(%arg0: i32) -> (i32, i32, i32) {
    %c0_i32 = arith.constant 0 : i32
    %c0_i32_0 = arith.constant 0 : i32
    %c0_i32_1 = arith.constant 0 : i32
    return %arg0, %c0_i32, %c0_i32_0 : i32, i32, i32
  }
  func.func @transform_5(%arg0: i32) -> (i32, i32, i32) {
    %c0_i32 = arith.constant 0 : i32
    %c0_i32_0 = arith.constant 0 : i32
    %c0_i32_1 = arith.constant 0 : i32
    return %arg0, %c0_i32, %c0_i32_0 : i32, i32, i32
  }
}

module attributes {stable_mosaic.version = 11 : i64} {
  func.func @_bn_relu_kernel(%arg0: i32, %arg1: memref<2x16x128xbf16, #tpu.memory_space<vmem>>, %arg2: memref<1x128xf32, #tpu.memory_space<vmem>>, %arg3: memref<1x128xf32, #tpu.memory_space<vmem>>, %arg4: memref<2x16x128xf32, #tpu.memory_space<vmem>>) attributes {dimension_semantics = [#tpu.dimension_semantics<parallel>], iteration_bounds = array<i64: 1>, scalar_prefetch = 0 : i64, scratch_operands = 0 : i64, tpu.core_type = #tpu.core_type<tc>, window_params = [{transform_indices = @transform_0, window_bounds = array<i64: 2, 16, 128>}, {pipeline_mode = #tpu.pipeline_mode<synchronous>, transform_indices = @transform_1, window_bounds = array<i64: 1, 128>}, {pipeline_mode = #tpu.pipeline_mode<synchronous>, transform_indices = @transform_2, window_bounds = array<i64: 1, 128>}, {transform_indices = @transform_3, window_bounds = array<i64: 2, 16, 128>}]} {
    %c0 = arith.constant 0 : index
    %c0_0 = arith.constant 0 : index
    %c0_1 = arith.constant 0 : index
    %0 = vector.load %arg1[%c0, %c0_0, %c0_1] : memref<2x16x128xbf16, #tpu.memory_space<vmem>>, vector<2x16x128xbf16>
    %1 = arith.extf %0 : vector<2x16x128xbf16> to vector<2x16x128xf32>
    %c0_2 = arith.constant 0 : index
    %c0_3 = arith.constant 0 : index
    %2 = vector.load %arg2[%c0_2, %c0_3] : memref<1x128xf32, #tpu.memory_space<vmem>>, vector<1x128xf32>
    %3 = vector.shape_cast %2 : vector<1x128xf32> to vector<1x1x128xf32>
    %4 = vector.broadcast %3 : vector<1x1x128xf32> to vector<2x16x128xf32>
    %5 = arith.mulf %1, %4 : vector<2x16x128xf32>
    %c0_4 = arith.constant 0 : index
    %c0_5 = arith.constant 0 : index
    %6 = vector.load %arg3[%c0_4, %c0_5] : memref<1x128xf32, #tpu.memory_space<vmem>>, vector<1x128xf32>
    %7 = vector.shape_cast %6 : vector<1x128xf32> to vector<1x1x128xf32>
    %8 = vector.broadcast %7 : vector<1x1x128xf32> to vector<2x16x128xf32>
    %9 = arith.addf %5, %8 : vector<2x16x128xf32>
    %cst = arith.constant 0.000000e+00 : f32
    %10 = vector.broadcast %cst : f32 to vector<2x16x128xf32>
    %11 = arith.maximumf %9, %10 : vector<2x16x128xf32>
    %c0_6 = arith.constant 0 : index
    %c0_7 = arith.constant 0 : index
    %c0_8 = arith.constant 0 : index
    %12 = vector.load %arg4[%c0_6, %c0_7, %c0_8] : memref<2x16x128xf32, #tpu.memory_space<vmem>>, vector<2x16x128xf32>
    tpu.vector_store %arg4[%c0_6, %c0_7, %c0_8], %11 {strides = array<i32>} : memref<2x16x128xf32, #tpu.memory_space<vmem>>, vector<2x16x128xf32>,
    return
  }
  func.func @transform_0(%arg0: i32) -> (i32, i32, i32) {
    %c0_i32 = arith.constant 0 : i32
    %c0_i32_0 = arith.constant 0 : i32
    %c0_i32_1 = arith.constant 0 : i32
    return %arg0, %c0_i32, %c0_i32_0 : i32, i32, i32
  }
  func.func @transform_1(%arg0: i32) -> (i32, i32) {
    %c0_i32 = arith.constant 0 : i32
    %c0_i32_0 = arith.constant 0 : i32
    %c0_i32_1 = arith.constant 0 : i32
    return %c0_i32, %c0_i32_0 : i32, i32
  }
  func.func @transform_2(%arg0: i32) -> (i32, i32) {
    %c0_i32 = arith.constant 0 : i32
    %c0_i32_0 = arith.constant 0 : i32
    %c0_i32_1 = arith.constant 0 : i32
    return %c0_i32, %c0_i32_0 : i32, i32
  }
  func.func @transform_3(%arg0: i32) -> (i32, i32, i32) {
    %c0_i32 = arith.constant 0 : i32
    %c0_i32_0 = arith.constant 0 : i32
    %c0_i32_1 = arith.constant 0 : i32
    return %arg0, %c0_i32, %c0_i32_0 : i32, i32, i32
  }
}

</mosaic_0001>

<llo_original>
// kernel: double_conv.3
$region0: #{double_conv.3}
  #allocation0 [shape = 'u32[]', space=smem, size = 0x4, offset = 0x4, fixed_abs, tag = 'smem constant byte address 0x4 - core index']
  #allocation1 [shape = 'u32[72,128]{1,0:T(1,128)}', space=vmem, size = 0x9000, scoped, tag = 'internal scratch']
  #allocation2 [shape = 'bf16[2,16,192]{2,1,0:T(8,128)(2,1)}', space=vmem, size = 0x4000, scoped, tag = 'scratch operand']
  %s0 = inlined_call_operand.vmem [shape: bf16[2,16,64], index: 0, kind: input, shape index: {}]
  %s1 = inlined_call_operand.vmem [shape: bf16[192,128], index: 1, kind: input, shape index: {}]
  %s2 = inlined_call_operand.vmem [shape: bf16[2,16,128], index: 2, kind: output, shape index: {0}]
  %s3 = inlined_call_operand.vmem [shape: f32[1,2,128], index: 3, kind: output, shape index: {1}]
  %4 = xla_tuple %s2, %s3
  %s5 = sld [smem:[#allocation0]]
  $region26: #{double_conv.3} parent=0
    _
  %s7 = ssub.s32 1, %s5
  %s8 = scalar_select 0, %s7, %s5
  // Predicated region
  $region2: #{double_conv.3} parent=0 // pred_check
    _
  $region3: #{double_conv.3} parent=0 // pred_check_branch
    %10 = sbr.rel (0) target = $region5
  $region4: #{double_conv.3} parent=0 // pred_region
    _
  $region5: #{double_conv.3} parent=0 // pred_fallthru
    _
  // Predicated region
  $region6: #{double_conv.3} parent=0 // pred_check
    _
  $region7: #{double_conv.3} parent=0 // pred_check_branch
    %12 = sbr.rel (0) target = $region9
  $region8: #{double_conv.3} parent=0 // pred_region
    _
  $region9: #{double_conv.3} parent=0 // pred_fallthru
    _
  %v14 = vld [vmem:[%s0] sm:$0xf]
  %v15 = vld [vmem:[%s0 + $0x4] sm:$0xf]
  %v16 = vld [vmem:[%s0 + $0x8] sm:$0xf]
  %v17 = vld [vmem:[%s0 + $0xc] sm:$0xf]
  %vm18 = vcmask 516096
  %vm19 = vsmask.f32 256
  %vm20 = vmand %vm18, %vm19
  %v21 = vld [vmem:[#allocation2] sm:$0x1]
  %v22 = vsel %vm20, 0, %v21
  %23 = vst [vmem:[#allocation2] sm:$0x1] %v22
  %v24 = vld [vmem:[#allocation2 + $0x10] sm:$0x1]
  %v25 = vsel %vm20, 0, %v24
  %26 = vst [vmem:[#allocation2 + $0x10] sm:$0x1] %v25
  %vm27 = vsmask.f32 4368
  %vm28 = vmor %vm19, %vm27
  %v30 = vshrl.u32 %v14, 16
  %v32 = vrot.slane %v30, 7
  %v33 = vshll.u32 %v14, 16
  %v35 = vor.u32 %v32, %v33
  %v36 = vrot.slane %v32, 4
  %v38 = vshrl.u32 %v15, 16
  %v40 = vrot.slane %v38, 7
  %v41 = vshll.u32 %v15, 16
  %v43 = vor.u32 %v40, %v41
  %v44 = vsel %vm28, %v36, %v43
  %v46 = vshrl.u32 %v16, 16
  %v48 = vrot.slane %v46, 7
  %v49 = vshll.u32 %v16, 16
  %v51 = vor.u32 %v48, %v49
  %v52 = vrot.slane %v48, 4
  %v54 = vshrl.u32 %v17, 16
  %v56 = vrot.slane %v54, 7
  %v57 = vshll.u32 %v17, 16
  %v59 = vor.u32 %v56, %v57
  %v60 = vsel %vm28, %v52, %v59
  %vm65 = vcmask 519168
  %vm66 = vsmask.f32 7938
  %vm67 = vmand %vm65, %vm66
  %v68 = vld [vmem:[#allocation2] sm:$0xf]
  %v69 = vsel %vm67, %v35, %v68
  %70 = vst [vmem:[#allocation2] sm:$0xf] %v69
  %vm71 = vcmask 519168
  %72 = vst.msk [vmem:[#allocation2 + $0x8] sm:$0xf] %vm71, %v44
  %v73 = vld [vmem:[#allocation2 + $0x10] sm:$0xf]
  %v74 = vsel %vm67, %v51, %v73
  %75 = vst [vmem:[#allocation2 + $0x10] sm:$0xf] %v74
  %76 = vst.msk [vmem:[#allocation2 + $0x18] sm:$0xf] %vm71, %v60
  %81 = vrot.lane.b32.xlu0 %v14, 64
  %v82 = vpop.permute.xlu0 %81
  %83 = vrot.lane.b32.xlu0 %v15, 64
  %v84 = vpop.permute.xlu0 %83
  %85 = vrot.lane.b32.xlu0 %v16, 64
  %v86 = vpop.permute.xlu0 %85
  %87 = vrot.lane.b32.xlu0 %v17, 64
  %v88 = vpop.permute.xlu0 %87
  %vm93 = vcmask 1043968
  %94 = vst.msk [vmem:[#allocation2] sm:$0xf] %vm93, %v82
  %95 = vst.msk [vmem:[#allocation2 + $0x8] sm:$0xf] %vm93, %v84
  %96 = vst.msk [vmem:[#allocation2 + $0x10] sm:$0xf] %vm93, %v86
  %97 = vst.msk [vmem:[#allocation2 + $0x18] sm:$0xf] %vm93, %v88
  %vm98 = vsmask.f32 3328
  %vm99 = vsmask.f32 7440
  %vm100 = vmor %vm98, %vm99
  %v101 = vrot.slane %v30, 4
  %v102 = vrot.slane %v33, 5
  %v103 = vor.u32 %v101, %v102
  %v104 = vrot.slane %v103, 4
  %v105 = vrot.slane %v41, 5
  %v106 = vsel %vm100, %v104, %v105
  %v107 = vrot.slane %v38, 4
  %v108 = vor.u32 %v107, %v105
  %v109 = vrot.slane %v108, 4
  %v110 = vrot.slane %v46, 4
  %v111 = vrot.slane %v49, 5
  %v112 = vor.u32 %v110, %v111
  %v113 = vrot.slane %v112, 4
  %v114 = vrot.slane %v57, 5
  %v115 = vsel %vm100, %v113, %v114
  %v116 = vrot.slane %v54, 4
  %v117 = vor.u32 %v116, %v114
  %v118 = vrot.slane %v117, 4
  %123 = vst.msk [vmem:[#allocation2 + $0x4] sm:$0xf] %vm71, %v106
  %vm124 = vmand %vm65, %vm98
  %v125 = vld [vmem:[#allocation2 + $0xc] sm:$0xf]
  %v126 = vsel %vm124, %v109, %v125
  %127 = vst [vmem:[#allocation2 + $0xc] sm:$0xf] %v126
  %128 = vst.msk [vmem:[#allocation2 + $0x14] sm:$0xf] %vm71, %v115
  %v129 = vld [vmem:[#allocation2 + $0x1c] sm:$0xf]
  %v130 = vsel %vm124, %v118, %v129
  %131 = vst [vmem:[#allocation2 + $0x1c] sm:$0xf] %v130
  %vm132 = vcmask 519171
  %vm133 = vsmask.f32 7950
  %vm134 = vmand %vm132, %vm133
  %v135 = vld [vmem:[#allocation2 + $0xc] sm:$0x8]
  %v136 = vsel %vm134, 0, %v135
  %137 = vst [vmem:[#allocation2 + $0xc] sm:$0x8] %v136
  %v138 = vld [vmem:[#allocation2 + $0x1c] sm:$0x8]
  %v139 = vsel %vm134, 0, %v138
  %140 = vst [vmem:[#allocation2 + $0x1c] sm:$0x8] %v139
  %v141 = vld [vmem:[#allocation2] sm:$0xff]
  %v142 = vld [vmem:[#allocation2 + $0x8] sm:$0xff]
  %v143 = vld [vmem:[#allocation2 + $0x10] sm:$0xff]
  %v144 = vld [vmem:[#allocation2 + $0x18] sm:$0xff]
  %v145 = vld [vmem:[%s1] sm:$0xf]
  %v146 = vld [vmem:[%s1 + $0x4] sm:$0xf]
  %v147 = vld [vmem:[%s1 + $0x8] sm:$0xf]
  %v148 = vld [vmem:[%s1 + $0xc] sm:$0xf]
  %v149 = vld [vmem:[%s1 + $0x10] sm:$0xf]
  %v150 = vld [vmem:[%s1 + $0x14] sm:$0xf]
  %v151 = vld [vmem:[%s1 + $0x18] sm:$0xf]
  %v152 = vld [vmem:[%s1 + $0x1c] sm:$0xf]
  %v153 = vld [vmem:[%s1 + $0x20] sm:$0xf]
  %v154 = vld [vmem:[%s1 + $0x24] sm:$0xf]
  %v155 = vld [vmem:[%s1 + $0x28] sm:$0xf]
  %v156 = vld [vmem:[%s1 + $0x2c] sm:$0xf]
  %v157 = vld [vmem:[%s1 + $0x30] sm:$0xf]
  %v158 = vld [vmem:[%s1 + $0x34] sm:$0xf]
  %v159 = vld [vmem:[%s1 + $0x38] sm:$0xf]
  %v160 = vld [vmem:[%s1 + $0x3c] sm:$0xf]
  %v161 = vld [vmem:[%s1 + $0x40] sm:$0xf]
  %v162 = vld [vmem:[%s1 + $0x44] sm:$0xf]
  %v163 = vld [vmem:[%s1 + $0x48] sm:$0xf]
  %v164 = vld [vmem:[%s1 + $0x4c] sm:$0xf]
  %v165 = vld [vmem:[%s1 + $0x50] sm:$0xf]
  %v166 = vld [vmem:[%s1 + $0x54] sm:$0xf]
  %v167 = vld [vmem:[%s1 + $0x58] sm:$0xf]
  %v168 = vld [vmem:[%s1 + $0x5c] sm:$0xf]
  %v173 = vunpack.c.l.b16 %v141
  %v174 = vunpack.c.h.b16 %v141
  %v175 = vunpack.c.l.b16 %v142
  %v176 = vunpack.c.h.b16 %v142
  %v177 = vunpack.c.l.b16 %v143
  %v178 = vunpack.c.h.b16 %v143
  %v179 = vunpack.c.l.b16 %v144
  %v180 = vunpack.c.h.b16 %v144
  %v181 = vpack.c.b16 %v175, %v173
  %v182 = vpack.c.b16 %v176, %v174
  %v183 = vpack.c.b16 %v179, %v177
  %v184 = vpack.c.b16 %v180, %v178
  %v211 = vunpack.c.l.b16 %v145
  %v212 = vunpack.c.l.b16 %v146
  %v213 = vunpack.c.l.b16 %v147
  %v214 = vunpack.c.l.b16 %v148
  %v215 = vunpack.c.l.b16 %v149
  %v216 = vunpack.c.l.b16 %v150
  %v217 = vunpack.c.l.b16 %v151
  %v218 = vunpack.c.l.b16 %v152
  %v219 = vunpack.c.l.b16 %v153
  %v220 = vunpack.c.l.b16 %v154
  %v221 = vunpack.c.l.b16 %v155
  %v222 = vunpack.c.l.b16 %v156
  %v223 = vunpack.c.l.b16 %v157
  %v224 = vunpack.c.l.b16 %v158
  %v225 = vunpack.c.l.b16 %v159
  %v226 = vunpack.c.l.b16 %v160
  %v227 = vunpack.c.l.b16 %v161
  %v228 = vunpack.c.l.b16 %v162
  %v229 = vunpack.c.l.b16 %v163
  %v230 = vunpack.c.l.b16 %v164
  %v231 = vunpack.c.l.b16 %v165
  %v232 = vunpack.c.l.b16 %v166
  %v233 = vunpack.c.l.b16 %v167
  %v234 = vunpack.c.l.b16 %v168
  %v235 = vpack.c.b16 %v212, %v211
  %v236 = vpack.c.b16 %v214, %v213
  %v237 = vpack.c.b16 %v216, %v215
  %v238 = vpack.c.b16 %v218, %v217
  %v239 = vpack.c.b16 %v220, %v219
  %v240 = vpack.c.b16 %v222, %v221
  %v241 = vpack.c.b16 %v224, %v223
  %v242 = vpack.c.b16 %v226, %v225
  %v243 = vpack.c.b16 %v228, %v227
  %v244 = vpack.c.b16 %v230, %v229
  %v245 = vpack.c.b16 %v232, %v231
  %v246 = vpack.c.b16 %v234, %v233
  %vm259 = vcmask 523264
  %v261 = vsel %vm259, %v182, 0
  %v264 = vsel %vm259, %v184, 0
  %266 = vmatpush.bf16.msra.mxu0 %v242
  %267 = vmatpush.bf16.msra.mxu0 %v241
  %268 = vmatpush.bf16.msra.mxu0 %v240
  %269 = vmatpush.bf16.msra.mxu0 %v239
  %270 = vmatpush.bf16.msra.mxu0 %v238
  %271 = vmatpush.bf16.msra.mxu0 %v237
  %272 = vmatpush.bf16.msra.mxu0 %v236
  %273 = vmatpush.bf16.msra.mxu0 %v235
  %274 = vmatmul.bf16.gmra.mxu0 %v181
  %v275 = vpop.f32.mrf.mxu0
  %v276 = vadd.f32 0.0, %v275
  %v277 = vpop.f32.mrf.mxu0
  %v278 = vadd.f32 0.0, %v277
  %279 = vmatmul.bf16.gmra.mxu0 %v183
  %v280 = vpop.f32.mrf.mxu0
  %v281 = vadd.f32 0.0, %v280
  %v282 = vpop.f32.mrf.mxu0
  %v283 = vadd.f32 0.0, %v282
  %284 = vdwg.mxu0
  %285 = vmatpush.bf16.msra.mxu0 0
  %286 = vmatpush.bf16.msra.mxu0 0
  %287 = vmatpush.bf16.msra.mxu0 0
  %288 = vmatpush.bf16.msra.mxu0 0
  %289 = vmatpush.bf16.msra.mxu0 %v246
  %290 = vmatpush.bf16.msra.mxu0 %v245
  %291 = vmatpush.bf16.msra.mxu0 %v244
  %292 = vmatpush.bf16.msra.mxu0 %v243
  %293 = vmatmul.bf16.gmra.mxu0 %v261
  %v294 = vpop.f32.mrf.mxu0
  %v295 = vadd.f32 %v276, %v294
  %v296 = vpop.f32.mrf.mxu0
  %v297 = vadd.f32 %v278, %v296
  %298 = vmatmul.bf16.gmra.mxu0 %v264
  %v299 = vpop.f32.mrf.mxu0
  %v300 = vadd.f32 %v281, %v299
  %v301 = vpop.f32.mrf.mxu0
  %v302 = vadd.f32 %v283, %v301
  %303 = vdwg.mxu0
  %v304 = vpack.c.bf16 %v295, %v295
  %v305 = vpack.c.bf16 %v297, %v297
  %v306 = vpack.c.bf16 %v300, %v300
  %v307 = vpack.c.bf16 %v302, %v302
  %308 = vst [vmem:[%s2] sm:$0xf] %v304
  %309 = vst [vmem:[%s2 + $0x4] sm:$0xf] %v305
  %310 = vst [vmem:[%s2 + $0x8] sm:$0xf] %v306
  %311 = vst [vmem:[%s2 + $0xc] sm:$0xf] %v307
  %v312 = vadd.f32 %v295, %v297
  %v313 = vadd.f32 %v312, %v300
  %v314 = vadd.f32 %v313, %v302
  %v315 = vrot.slane %v314, 4
  %v316 = vadd.f32 %v314, %v315
  %v317 = vrot.slane %v316, 2
  %v318 = vadd.f32 %v316, %v317
  %v319 = vrot.slane %v318, 1
  %v320 = vadd.f32 %v318, %v319
  %321 = vst [vmem:[%s3] sm:$0x1] %v320
  %v322 = vmul.f32 %v295, %v295
  %v323 = vmul.f32 %v297, %v297
  %v324 = vmul.f32 %v300, %v300
  %v325 = vmul.f32 %v302, %v302
  %v326 = vadd.f32 %v322, %v323
  %v327 = vadd.f32 %v326, %v324
  %v328 = vadd.f32 %v327, %v325
  %v329 = vrot.slane %v328, 4
  %v330 = vadd.f32 %v328, %v329
  %v331 = vrot.slane %v330, 2
  %v332 = vadd.f32 %v330, %v331
  %v333 = vrot.slane %v332, 1
  %v334 = vadd.f32 %v332, %v333
  %335 = vst [vmem:[%s3 + $0x1] sm:$0x1] %v334
  // Predicated region
  $region10: #{double_conv.3} parent=0 // pred_check
    _
  $region11: #{double_conv.3} parent=0 // pred_check_branch
    %337 = sbr.rel (0) target = $region13
  $region12: #{double_conv.3} parent=0 // pred_region
    _
  $region13: #{double_conv.3} parent=0 // pred_fallthru
    _
  // Predicated region
  $region14: #{double_conv.3} parent=0 // pred_check
    _
  $region15: #{double_conv.3} parent=0 // pred_check_branch
    %339 = sbr.rel (0) target = $region17
  $region16: #{double_conv.3} parent=0 // pred_region
    _
  $region17: #{double_conv.3} parent=0 // pred_fallthru
    _
  // Predicated region
  $region18: #{double_conv.3} parent=0 // pred_check
    _
  $region19: #{double_conv.3} parent=0 // pred_check_branch
    %341 = sbr.rel (0) target = $region21
  $region20: #{double_conv.3} parent=0 // pred_region
    _
  $region21: #{double_conv.3} parent=0 // pred_fallthru
    _
  // Predicated region
  $region22: #{double_conv.3} parent=0 // pred_check
    _
  $region23: #{double_conv.3} parent=0 // pred_check_branch
    %343 = sbr.rel (0) target = $region25
  $region24: #{double_conv.3} parent=0 // pred_region
    _
  $region25: #{double_conv.3} parent=0 // pred_fallthru
    _

// kernel: tile.28
$region0: #{tile.28}
  #allocation0 [shape = 's32[1]{0}', space=sflag, size = 0x4, scoped, tag = 'scoped memory for tile.28']
  %s0 = inlined_call_operand.vmem [shape: f32[8], index: 0, kind: input, shape index: {}]
  %s1 = inlined_call_operand.vmem [shape: f32[16,8], index: 1, kind: output, shape index: {}]
  // Predicated region
  $region2: #{tile.28} parent=0 // pred_check
    _
  $region3: #{tile.28} parent=0 // pred_check_branch
    %3 = sbr.rel (0) target = $region5
  $region4: #{tile.28} parent=0 // pred_region
    _
  $region5: #{tile.28} parent=0 // pred_fallthru
    _
  %v4 = vld [vmem:[%s0] ss:$0 sm:$0xff]
  %5 = vst [vmem:[%s1] sm:$0xff] %v4
  %s6 = scalar_lea.vmem %s1, 8
  %7 = vst [vmem:[%s6] sm:$0xff] %v4

// kernel: tile.29
$region0: #{tile.29}
  %s0 = inlined_call_operand.vmem [shape: f32[16,8], index: 0, kind: input, shape index: {}]
  %s1 = inlined_call_operand.vmem [shape: f32[1,128], index: 1, kind: output, shape index: {}]
  $region1: #{tile.29} parent=0
    #allocation0 [shape = 'u8[4096]{0}', space=vmem, size = 0x1000, scoped, tag = 'scoped mem for output reshape']
    %v2 = vld [vmem:[%s0] sm:$0x1]
    %vm3 = vcmask 64512
    %4 = vst.msk [vmem:[#allocation0] sm:$0x1] %vm3, %v2
    %s5 = scalar_lea.vmem %s0, 15
    %v6 = vld [vmem:[%s5] sm:$0x1]
    %7 = vrot.lane.b32.xlu0 %v6, 120
    %v8 = vpop.permute.xlu0 %7
    %vm9 = vcmask 1048512
    %10 = vst.msk [vmem:[#allocation0] sm:$0x1] %vm9, %v8
    %s11 = scalar_lea.vmem %s0, 14
    %v12 = vld [vmem:[%s11] sm:$0x1]
    %13 = vrot.lane.b32.xlu0 %v12, 112
    %v14 = vpop.permute.xlu0 %13
    %vm15 = vcmask 982912
    %16 = vst.msk [vmem:[#allocation0] sm:$0x1] %vm15, %v14
    %s17 = scalar_lea.vmem %s0, 13
    %v18 = vld [vmem:[%s17] sm:$0x1]
    %19 = vrot.lane.b32.xlu0 %v18, 104
    %v20 = vpop.permute.xlu0 %19
    %vm21 = vcmask 917312
    %22 = vst.msk [vmem:[#allocation0] sm:$0x1] %vm21, %v20
    %s23 = scalar_lea.vmem %s0, 12
    %v24 = vld [vmem:[%s23] sm:$0x1]
    %25 = vrot.lane.b32.xlu0 %v24, 96
    %v26 = vpop.permute.xlu0 %25
    %vm27 = vcmask 851712
    %28 = vst.msk [vmem:[#allocation0] sm:$0x1] %vm27, %v26
    %s29 = scalar_lea.vmem %s0, 11
    %v30 = vld [vmem:[%s29] sm:$0x1]
    %31 = vrot.lane.b32.xlu0 %v30, 88
    %v32 = vpop.permute.xlu0 %31
    %vm33 = vcmask 786112
    %34 = vst.msk [vmem:[#allocation0] sm:$0x1] %vm33, %v32
    %s35 = scalar_lea.vmem %s0, 10
    %v36 = vld [vmem:[%s35] sm:$0x1]
    %37 = vrot.lane.b32.xlu0 %v36, 80
    %v38 = vpop.permute.xlu0 %37
    %vm39 = vcmask 720512
    %40 = vst.msk [vmem:[#allocation0] sm:$0x1] %vm39, %v38
    %s41 = scalar_lea.vmem %s0, 9
    %v42 = vld [vmem:[%s41] sm:$0x1]
    %43 = vrot.lane.b32.xlu0 %v42, 72
    %v44 = vpop.permute.xlu0 %43
    %vm45 = vcmask 654912
    %46 = vst.msk [vmem:[#allocation0] sm:$0x1] %vm45, %v44
    %s47 = scalar_lea.vmem %s0, 8
    %v48 = vld [vmem:[%s47] sm:$0x1]
    %49 = vrot.lane.b32.xlu0 %v48, 64
    %v50 = vpop.permute.xlu0 %49
    %vm51 = vcmask 589312
    %52 = vst.msk [vmem:[#allocation0] sm:$0x1] %vm51, %v50
    %s53 = scalar_lea.vmem %s0, 7
    %v54 = vld [vmem:[%s53] sm:$0x1]
    %55 = vrot.lane.b32.xlu0 %v54, 56
    %v56 = vpop.permute.xlu0 %55
    %vm57 = vcmask 523712
    %58 = vst.msk [vmem:[#allocation0] sm:$0x1] %vm57, %v56
    %s59 = scalar_lea.vmem %s0, 6
    %v60 = vld [vmem:[%s59] sm:$0x1]
    %61 = vrot.lane.b32.xlu0 %v60, 48
    %v62 = vpop.permute.xlu0 %61
    %vm63 = vcmask 458112
    %64 = vst.msk [vmem:[#allocation0] sm:$0x1] %vm63, %v62
    %s65 = scalar_lea.vmem %s0, 5
    %v66 = vld [vmem:[%s65] sm:$0x1]
    %67 = vrot.lane.b32.xlu0 %v66, 40
    %v68 = vpop.permute.xlu0 %67
    %vm69 = vcmask 392512
    %70 = vst.msk [vmem:[#allocation0] sm:$0x1] %vm69, %v68
    %s71 = scalar_lea.vmem %s0, 4
    %v72 = vld [vmem:[%s71] sm:$0x1]
    %73 = vrot.lane.b32.xlu0 %v72, 32
    %v74 = vpop.permute.xlu0 %73
    %vm75 = vcmask 326912
    %76 = vst.msk [vmem:[#allocation0] sm:$0x1] %vm75, %v74
    %s77 = scalar_lea.vmem %s0, 3
    %v78 = vld [vmem:[%s77] sm:$0x1]
    %79 = vrot.lane.b32.xlu0 %v78, 24
    %v80 = vpop.permute.xlu0 %79
    %vm81 = vcmask 261312
    %82 = vst.msk [vmem:[#allocation0] sm:$0x1] %vm81, %v80
    %s83 = scalar_lea.vmem %s0, 2
    %v84 = vld [vmem:[%s83] sm:$0x1]
    %85 = vrot.lane.b32.xlu0 %v84, 16
    %v86 = vpop.permute.xlu0 %85
    %vm87 = vcmask 195712
    %88 = vst.msk [vmem:[#allocation0] sm:$0x1] %vm87, %v86
    %s89 = scalar_lea.vmem %s0, 1
    %v90 = vld [vmem:[%s89] sm:$0x1]
    %91 = vrot.lane.b32.xlu0 %v90, 8
    %v92 = vpop.permute.xlu0 %91
    %vm93 = vcmask 130112
    %94 = vst.msk [vmem:[#allocation0] sm:$0x1] %vm93, %v92
    %s96 = ssub.s32 2, 1
    %v97 = vld [vmem:[#allocation0] sm:%s96]
    %s99 = ssub.s32 2, 1
    %100 = vst [vmem:[%s1] sm:%s99] %v97

// kernel: double_conv.4
$region0: #{double_conv.4}
  #allocation0 [shape = 'u32[]', space=smem, size = 0x4, offset = 0x4, fixed_abs, tag = 'smem constant byte address 0x4 - core index']
  #allocation1 [shape = 'u32[72,128]{1,0:T(1,128)}', space=vmem, size = 0x9000, scoped, tag = 'internal scratch']
  #allocation2 [shape = 'bf16[2,16,384]{2,1,0:T(8,128)(2,1)}', space=vmem, size = 0x6000, scoped, tag = 'scratch operand']
  %s0 = inlined_call_operand.vmem [shape: bf16[2,16,128], index: 0, kind: input, shape index: {}]
  %s1 = inlined_call_operand.vmem [shape: bf16[384,128], index: 1, kind: input, shape index: {}]
  %s2 = inlined_call_operand.vmem [shape: f32[1,128], index: 2, kind: input, shape index: {}]
  %s3 = inlined_call_operand.vmem [shape: f32[1,128], index: 3, kind: input, shape index: {}]
  %s4 = inlined_call_operand.vmem [shape: bf16[2,16,128], index: 4, kind: output, shape index: {0}]
  %s5 = inlined_call_operand.vmem [shape: f32[1,2,128], index: 5, kind: output, shape index: {1}]
  %6 = xla_tuple %s4, %s5
  %s7 = sld [smem:[#allocation0]]
  $region34: #{double_conv.4} parent=0
    _
  %s9 = ssub.s32 1, %s7
  %s10 = scalar_select 0, %s9, %s7
  // Predicated region
  $region2: #{double_conv.4} parent=0 // pred_check
    _
  $region3: #{double_conv.4} parent=0 // pred_check_branch
    %12 = sbr.rel (0) target = $region5
  $region4: #{double_conv.4} parent=0 // pred_region
    _
  $region5: #{double_conv.4} parent=0 // pred_fallthru
    _
  // Predicated region
  $region6: #{double_conv.4} parent=0 // pred_check
    _
  $region7: #{double_conv.4} parent=0 // pred_check_branch
    %14 = sbr.rel (0) target = $region9
  $region8: #{double_conv.4} parent=0 // pred_region
    _
  $region9: #{double_conv.4} parent=0 // pred_fallthru
    _
  // Predicated region
  $region10: #{double_conv.4} parent=0 // pred_check
    _
  $region11: #{double_conv.4} parent=0 // pred_check_branch
    %16 = sbr.rel (0) target = $region13
  $region12: #{double_conv.4} parent=0 // pred_region
    _
  $region13: #{double_conv.4} parent=0 // pred_fallthru
    _
  // Predicated region
  $region14: #{double_conv.4} parent=0 // pred_check
    _
  $region15: #{double_conv.4} parent=0 // pred_check_branch
    %18 = sbr.rel (0) target = $region17
  $region16: #{double_conv.4} parent=0 // pred_region
    _
  $region17: #{double_conv.4} parent=0 // pred_fallthru
    _
  %v20 = vld [vmem:[%s0] sm:$0xf]
  %v21 = vld [vmem:[%s0 + $0x4] sm:$0xf]
  %v22 = vld [vmem:[%s0 + $0x8] sm:$0xf]
  %v23 = vld [vmem:[%s0 + $0xc] sm:$0xf]
  %v24 = vunpack.c.l.bf16 %v20
  %v25 = vunpack.c.l.bf16 %v21
  %v26 = vunpack.c.l.bf16 %v22
  %v27 = vunpack.c.l.bf16 %v23
  %v28 = vld [vmem:[%s2] sm:$0x1]
  %v30 = vperm.slane %v28, 0
  %v32 = vmul.f32 %v24, %v30
  %v33 = vmul.f32 %v25, %v30
  %v34 = vmul.f32 %v26, %v30
  %v35 = vmul.f32 %v27, %v30
  %v36 = vld [vmem:[%s3] sm:$0x1]
  %v38 = vperm.slane %v36, 0
  %v40 = vadd.f32 %v32, %v38
  %v41 = vadd.f32 %v33, %v38
  %v42 = vadd.f32 %v34, %v38
  %v43 = vadd.f32 %v35, %v38
  %v44 = vmax.f32 %v40, 0.0
  %v45 = vmax.f32 %v41, 0.0
  %v46 = vmax.f32 %v42, 0.0
  %v47 = vmax.f32 %v43, 0.0
  %v48 = vpack.c.bf16 %v44, %v44
  %v49 = vpack.c.bf16 %v45, %v45
  %v50 = vpack.c.bf16 %v46, %v46
  %v51 = vpack.c.bf16 %v47, %v47
  %vm52 = vcmask 1040384
  %vm53 = vsmask.f32 256
  %vm54 = vmand %vm52, %vm53
  %v55 = vld [vmem:[#allocation2] sm:$0x1]
  %v56 = vsel %vm54, 0, %v55
  %57 = vst [vmem:[#allocation2] sm:$0x1] %v56
  %v58 = vld [vmem:[#allocation2 + $0x18] sm:$0x1]
  %v59 = vsel %vm54, 0, %v58
  %60 = vst [vmem:[#allocation2 + $0x18] sm:$0x1] %v59
  %vm61 = vsmask.f32 4368
  %vm62 = vmor %vm53, %vm61
  %v64 = vshrl.u32 %v48, 16
  %v66 = vrot.slane %v64, 7
  %v67 = vshll.u32 %v48, 16
  %v69 = vor.u32 %v66, %v67
  %v70 = vrot.slane %v66, 4
  %v72 = vshrl.u32 %v49, 16
  %v74 = vrot.slane %v72, 7
  %v75 = vshll.u32 %v49, 16
  %v77 = vor.u32 %v74, %v75
  %v78 = vsel %vm62, %v70, %v77
  %v80 = vshrl.u32 %v50, 16
  %v82 = vrot.slane %v80, 7
  %v83 = vshll.u32 %v50, 16
  %v85 = vor.u32 %v82, %v83
  %v86 = vrot.slane %v82, 4
  %v88 = vshrl.u32 %v51, 16
  %v90 = vrot.slane %v88, 7
  %v91 = vshll.u32 %v51, 16
  %v93 = vor.u32 %v90, %v91
  %v94 = vsel %vm62, %v86, %v93
  %vm99 = vcmask 1043456
  %vm100 = vsmask.f32 7938
  %vm101 = vmand %vm99, %vm100
  %v102 = vld [vmem:[#allocation2] sm:$0xf]
  %v103 = vsel %vm101, %v69, %v102
  %104 = vst [vmem:[#allocation2] sm:$0xf] %v103
  %105 = vst [vmem:[#allocation2 + $0xc] sm:$0xf] %v78
  %v106 = vld [vmem:[#allocation2 + $0x18] sm:$0xf]
  %v107 = vsel %vm101, %v85, %v106
  %108 = vst [vmem:[#allocation2 + $0x18] sm:$0xf] %v107
  %109 = vst [vmem:[#allocation2 + $0x24] sm:$0xf] %v94
  %110 = vst [vmem:[#allocation2 + $0x4] sm:$0xf] %v48
  %111 = vst [vmem:[#allocation2 + $0x10] sm:$0xf] %v49
  %112 = vst [vmem:[#allocation2 + $0x1c] sm:$0xf] %v50
  %113 = vst [vmem:[#allocation2 + $0x28] sm:$0xf] %v51
  %vm114 = vsmask.f32 3328
  %vm115 = vsmask.f32 7440
  %vm116 = vmor %vm114, %vm115
  %v117 = vrot.slane %v64, 4
  %v118 = vrot.slane %v67, 5
  %v119 = vor.u32 %v117, %v118
  %v120 = vrot.slane %v119, 4
  %v121 = vrot.slane %v75, 5
  %v122 = vsel %vm116, %v120, %v121
  %v123 = vrot.slane %v72, 4
  %v124 = vor.u32 %v123, %v121
  %v125 = vrot.slane %v124, 4
  %v126 = vrot.slane %v80, 4
  %v127 = vrot.slane %v83, 5
  %v128 = vor.u32 %v126, %v127
  %v129 = vrot.slane %v128, 4
  %v130 = vrot.slane %v91, 5
  %v131 = vsel %vm116, %v129, %v130
  %v132 = vrot.slane %v88, 4
  %v133 = vor.u32 %v132, %v130
  %v134 = vrot.slane %v133, 4
  %139 = vst [vmem:[#allocation2 + $0x8] sm:$0xf] %v122
  %vm140 = vmand %vm99, %vm114
  %v141 = vld [vmem:[#allocation2 + $0x14] sm:$0xf]
  %v142 = vsel %vm140, %v125, %v141
  %143 = vst [vmem:[#allocation2 + $0x14] sm:$0xf] %v142
  %144 = vst [vmem:[#allocation2 + $0x20] sm:$0xf] %v131
  %v145 = vld [vmem:[#allocation2 + $0x2c] sm:$0xf]
  %v146 = vsel %vm140, %v134, %v145
  %147 = vst [vmem:[#allocation2 + $0x2c] sm:$0xf] %v146
  %vm148 = vcmask 1043459
  %vm149 = vsmask.f32 7950
  %vm150 = vmand %vm148, %vm149
  %v151 = vld [vmem:[#allocation2 + $0x14] sm:$0x8]
  %v152 = vsel %vm150, 0, %v151
  %153 = vst [vmem:[#allocation2 + $0x14] sm:$0x8] %v152
  %v154 = vld [vmem:[#allocation2 + $0x2c] sm:$0x8]
  %v155 = vsel %vm150, 0, %v154
  %156 = vst [vmem:[#allocation2 + $0x2c] sm:$0x8] %v155
  %v157 = vld [vmem:[#allocation2] sm:$0xff]
  %v158 = vld [vmem:[#allocation2 + $0x8] sm:$0xf]
  %v159 = vld [vmem:[#allocation2 + $0xc] sm:$0xff]
  %v160 = vld [vmem:[#allocation2 + $0x14] sm:$0xf]
  %v161 = vld [vmem:[#allocation2 + $0x18] sm:$0xff]
  %v162 = vld [vmem:[#allocation2 + $0x20] sm:$0xf]
  %v163 = vld [vmem:[#allocation2 + $0x24] sm:$0xff]
  %v164 = vld [vmem:[#allocation2 + $0x2c] sm:$0xf]
  %v165 = vld [vmem:[%s1] sm:$0xf]
  %v166 = vld [vmem:[%s1 + $0x4] sm:$0xf]
  %v167 = vld [vmem:[%s1 + $0x8] sm:$0xf]
  %v168 = vld [vmem:[%s1 + $0xc] sm:$0xf]
  %v169 = vld [vmem:[%s1 + $0x10] sm:$0xf]
  %v170 = vld [vmem:[%s1 + $0x14] sm:$0xf]
  %v171 = vld [vmem:[%s1 + $0x18] sm:$0xf]
  %v172 = vld [vmem:[%s1 + $0x1c] sm:$0xf]
  %v173 = vld [vmem:[%s1 + $0x20] sm:$0xf]
  %v174 = vld [vmem:[%s1 + $0x24] sm:$0xf]
  %v175 = vld [vmem:[%s1 + $0x28] sm:$0xf]
  %v176 = vld [vmem:[%s1 + $0x2c] sm:$0xf]
  %v177 = vld [vmem:[%s1 + $0x30] sm:$0xf]
  %v178 = vld [vmem:[%s1 + $0x34] sm:$0xf]
  %v179 = vld [vmem:[%s1 + $0x38] sm:$0xf]
  %v180 = vld [vmem:[%s1 + $0x3c] sm:$0xf]
  %v181 = vld [vmem:[%s1 + $0x40] sm:$0xf]
  %v182 = vld [vmem:[%s1 + $0x44] sm:$0xf]
  %v183 = vld [vmem:[%s1 + $0x48] sm:$0xf]
  %v184 = vld [vmem:[%s1 + $0x4c] sm:$0xf]
  %v185 = vld [vmem:[%s1 + $0x50] sm:$0xf]
  %v186 = vld [vmem:[%s1 + $0x54] sm:$0xf]
  %v187 = vld [vmem:[%s1 + $0x58] sm:$0xf]
  %v188 = vld [vmem:[%s1 + $0x5c] sm:$0xf]
  %v189 = vld [vmem:[%s1 + $0x60] sm:$0xf]
  %v190 = vld [vmem:[%s1 + $0x64] sm:$0xf]
  %v191 = vld [vmem:[%s1 + $0x68] sm:$0xf]
  %v192 = vld [vmem:[%s1 + $0x6c] sm:$0xf]
  %v193 = vld [vmem:[%s1 + $0x70] sm:$0xf]
  %v194 = vld [vmem:[%s1 + $0x74] sm:$0xf]
  %v195 = vld [vmem:[%s1 + $0x78] sm:$0xf]
  %v196 = vld [vmem:[%s1 + $0x7c] sm:$0xf]
  %v197 = vld [vmem:[%s1 + $0x80] sm:$0xf]
  %v198 = vld [vmem:[%s1 + $0x84] sm:$0xf]
  %v199 = vld [vmem:[%s1 + $0x88] sm:$0xf]
  %v200 = vld [vmem:[%s1 + $0x8c] sm:$0xf]
  %v201 = vld [vmem:[%s1 + $0x90] sm:$0xf]
  %v202 = vld [vmem:[%s1 + $0x94] sm:$0xf]
  %v203 = vld [vmem:[%s1 + $0x98] sm:$0xf]
  %v204 = vld [vmem:[%s1 + $0x9c] sm:$0xf]
  %v205 = vld [vmem:[%s1 + $0xa0] sm:$0xf]
  %v206 = vld [vmem:[%s1 + $0xa4] sm:$0xf]
  %v207 = vld [vmem:[%s1 + $0xa8] sm:$0xf]
  %v208 = vld [vmem:[%s1 + $0xac] sm:$0xf]
  %v209 = vld [vmem:[%s1 + $0xb0] sm:$0xf]
  %v210 = vld [vmem:[%s1 + $0xb4] sm:$0xf]
  %v211 = vld [vmem:[%s1 + $0xb8] sm:$0xf]
  %v212 = vld [vmem:[%s1 + $0xbc] sm:$0xf]
  %v221 = vunpack.c.l.b16 %v157
  %v222 = vunpack.c.h.b16 %v157
  %v223 = vunpack.c.l.b16 %v158
  %v224 = vunpack.c.l.b16 %v159
  %v225 = vunpack.c.h.b16 %v159
  %v226 = vunpack.c.l.b16 %v160
  %v227 = vunpack.c.l.b16 %v161
  %v228 = vunpack.c.h.b16 %v161
  %v229 = vunpack.c.l.b16 %v162
  %v230 = vunpack.c.l.b16 %v163
  %v231 = vunpack.c.h.b16 %v163
  %v232 = vunpack.c.l.b16 %v164
  %v233 = vpack.c.b16 %v224, %v221
  %v234 = vpack.c.b16 %v225, %v222
  %v235 = vpack.c.b16 %v226, %v223
  %v236 = vpack.c.b16 %v230, %v227
  %v237 = vpack.c.b16 %v231, %v228
  %v238 = vpack.c.b16 %v232, %v229
  %v293 = vunpack.c.l.b16 %v165
  %v294 = vunpack.c.l.b16 %v166
  %v295 = vunpack.c.l.b16 %v167
  %v296 = vunpack.c.l.b16 %v168
  %v297 = vunpack.c.l.b16 %v169
  %v298 = vunpack.c.l.b16 %v170
  %v299 = vunpack.c.l.b16 %v171
  %v300 = vunpack.c.l.b16 %v172
  %v301 = vunpack.c.l.b16 %v173
  %v302 = vunpack.c.l.b16 %v174
  %v303 = vunpack.c.l.b16 %v175
  %v304 = vunpack.c.l.b16 %v176
  %v305 = vunpack.c.l.b16 %v177
  %v306 = vunpack.c.l.b16 %v178
  %v307 = vunpack.c.l.b16 %v179
  %v308 = vunpack.c.l.b16 %v180
  %v309 = vunpack.c.l.b16 %v181
  %v310 = vunpack.c.l.b16 %v182
  %v311 = vunpack.c.l.b16 %v183
  %v312 = vunpack.c.l.b16 %v184
  %v313 = vunpack.c.l.b16 %v185
  %v314 = vunpack.c.l.b16 %v186
  %v315 = vunpack.c.l.b16 %v187
  %v316 = vunpack.c.l.b16 %v188
  %v317 = vunpack.c.l.b16 %v189
  %v318 = vunpack.c.l.b16 %v190
  %v319 = vunpack.c.l.b16 %v191
  %v320 = vunpack.c.l.b16 %v192
  %v321 = vunpack.c.l.b16 %v193
  %v322 = vunpack.c.l.b16 %v194
  %v323 = vunpack.c.l.b16 %v195
  %v324 = vunpack.c.l.b16 %v196
  %v325 = vunpack.c.l.b16 %v197
  %v326 = vunpack.c.l.b16 %v198
  %v327 = vunpack.c.l.b16 %v199
  %v328 = vunpack.c.l.b16 %v200
  %v329 = vunpack.c.l.b16 %v201
  %v330 = vunpack.c.l.b16 %v202
  %v331 = vunpack.c.l.b16 %v203
  %v332 = vunpack.c.l.b16 %v204
  %v333 = vunpack.c.l.b16 %v205
  %v334 = vunpack.c.l.b16 %v206
  %v335 = vunpack.c.l.b16 %v207
  %v336 = vunpack.c.l.b16 %v208
  %v337 = vunpack.c.l.b16 %v209
  %v338 = vunpack.c.l.b16 %v210
  %v339 = vunpack.c.l.b16 %v211
  %v340 = vunpack.c.l.b16 %v212
  %v341 = vpack.c.b16 %v294, %v293
  %v342 = vpack.c.b16 %v296, %v295
  %v343 = vpack.c.b16 %v298, %v297
  %v344 = vpack.c.b16 %v300, %v299
  %v345 = vpack.c.b16 %v302, %v301
  %v346 = vpack.c.b16 %v304, %v303
  %v347 = vpack.c.b16 %v306, %v305
  %v348 = vpack.c.b16 %v308, %v307
  %v349 = vpack.c.b16 %v310, %v309
  %v350 = vpack.c.b16 %v312, %v311
  %v351 = vpack.c.b16 %v314, %v313
  %v352 = vpack.c.b16 %v316, %v315
  %v353 = vpack.c.b16 %v318, %v317
  %v354 = vpack.c.b16 %v320, %v319
  %v355 = vpack.c.b16 %v322, %v321
  %v356 = vpack.c.b16 %v324, %v323
  %v357 = vpack.c.b16 %v326, %v325
  %v358 = vpack.c.b16 %v328, %v327
  %v359 = vpack.c.b16 %v330, %v329
  %v360 = vpack.c.b16 %v332, %v331
  %v361 = vpack.c.b16 %v334, %v333
  %v362 = vpack.c.b16 %v336, %v335
  %v363 = vpack.c.b16 %v338, %v337
  %v364 = vpack.c.b16 %v340, %v339
  %389 = vmatpush.bf16.msra.mxu0 %v348
  %390 = vmatpush.bf16.msra.mxu0 %v347
  %391 = vmatpush.bf16.msra.mxu0 %v346
  %392 = vmatpush.bf16.msra.mxu0 %v345
  %393 = vmatpush.bf16.msra.mxu0 %v344
  %394 = vmatpush.bf16.msra.mxu0 %v343
  %395 = vmatpush.bf16.msra.mxu0 %v342
  %396 = vmatpush.bf16.msra.mxu0 %v341
  %397 = vmatmul.bf16.gmra.mxu0 %v233
  %v398 = vpop.f32.mrf.mxu0
  %v399 = vadd.f32 0.0, %v398
  %v400 = vpop.f32.mrf.mxu0
  %v401 = vadd.f32 0.0, %v400
  %402 = vmatmul.bf16.gmra.mxu0 %v236
  %v403 = vpop.f32.mrf.mxu0
  %v404 = vadd.f32 0.0, %v403
  %v405 = vpop.f32.mrf.mxu0
  %v406 = vadd.f32 0.0, %v405
  %407 = vdwg.mxu0
  %408 = vmatpush.bf16.msra.mxu0 %v356
  %409 = vmatpush.bf16.msra.mxu0 %v355
  %410 = vmatpush.bf16.msra.mxu0 %v354
  %411 = vmatpush.bf16.msra.mxu0 %v353
  %412 = vmatpush.bf16.msra.mxu0 %v352
  %413 = vmatpush.bf16.msra.mxu0 %v351
  %414 = vmatpush.bf16.msra.mxu0 %v350
  %415 = vmatpush.bf16.msra.mxu0 %v349
  %416 = vmatmul.bf16.gmra.mxu0 %v234
  %v417 = vpop.f32.mrf.mxu0
  %v418 = vadd.f32 %v399, %v417
  %v419 = vpop.f32.mrf.mxu0
  %v420 = vadd.f32 %v401, %v419
  %421 = vmatmul.bf16.gmra.mxu0 %v237
  %v422 = vpop.f32.mrf.mxu0
  %v423 = vadd.f32 %v404, %v422
  %v424 = vpop.f32.mrf.mxu0
  %v425 = vadd.f32 %v406, %v424
  %426 = vdwg.mxu0
  %427 = vmatpush.bf16.msra.mxu0 %v364
  %428 = vmatpush.bf16.msra.mxu0 %v363
  %429 = vmatpush.bf16.msra.mxu0 %v362
  %430 = vmatpush.bf16.msra.mxu0 %v361
  %431 = vmatpush.bf16.msra.mxu0 %v360
  %432 = vmatpush.bf16.msra.mxu0 %v359
  %433 = vmatpush.bf16.msra.mxu0 %v358
  %434 = vmatpush.bf16.msra.mxu0 %v357
  %435 = vmatmul.bf16.gmra.mxu0 %v235
  %v436 = vpop.f32.mrf.mxu0
  %v437 = vadd.f32 %v418, %v436
  %v438 = vpop.f32.mrf.mxu0
  %v439 = vadd.f32 %v420, %v438
  %440 = vmatmul.bf16.gmra.mxu0 %v238
  %v441 = vpop.f32.mrf.mxu0
  %v442 = vadd.f32 %v423, %v441
  %v443 = vpop.f32.mrf.mxu0
  %v444 = vadd.f32 %v425, %v443
  %445 = vdwg.mxu0
  %v446 = vpack.c.bf16 %v437, %v437
  %v447 = vpack.c.bf16 %v439, %v439
  %v448 = vpack.c.bf16 %v442, %v442
  %v449 = vpack.c.bf16 %v444, %v444
  %450 = vst [vmem:[%s4] sm:$0xf] %v446
  %451 = vst [vmem:[%s4 + $0x4] sm:$0xf] %v447
  %452 = vst [vmem:[%s4 + $0x8] sm:$0xf] %v448
  %453 = vst [vmem:[%s4 + $0xc] sm:$0xf] %v449
  %v454 = vadd.f32 %v437, %v439
  %v455 = vadd.f32 %v454, %v442
  %v456 = vadd.f32 %v455, %v444
  %v457 = vrot.slane %v456, 4
  %v458 = vadd.f32 %v456, %v457
  %v459 = vrot.slane %v458, 2
  %v460 = vadd.f32 %v458, %v459
  %v461 = vrot.slane %v460, 1
  %v462 = vadd.f32 %v460, %v461
  %463 = vst [vmem:[%s5] sm:$0x1] %v462
  %v464 = vmul.f32 %v437, %v437
  %v465 = vmul.f32 %v439, %v439
  %v466 = vmul.f32 %v442, %v442
  %v467 = vmul.f32 %v444, %v444
  %v468 = vadd.f32 %v464, %v465
  %v469 = vadd.f32 %v468, %v466
  %v470 = vadd.f32 %v469, %v467
  %v471 = vrot.slane %v470, 4
  %v472 = vadd.f32 %v470, %v471
  %v473 = vrot.slane %v472, 2
  %v474 = vadd.f32 %v472, %v473
  %v475 = vrot.slane %v474, 1
  %v476 = vadd.f32 %v474, %v475
  %477 = vst [vmem:[%s5 + $0x1] sm:$0x1] %v476
  // Predicated region
  $region18: #{double_conv.4} parent=0 // pred_check
    _
  $region19: #{double_conv.4} parent=0 // pred_check_branch
    %479 = sbr.rel (0) target = $region21
  $region20: #{double_conv.4} parent=0 // pred_region
    _
  $region21: #{double_conv.4} parent=0 // pred_fallthru
    _
  // Predicated region
  $region22: #{double_conv.4} parent=0 // pred_check
    _
  $region23: #{double_conv.4} parent=0 // pred_check_branch
    %481 = sbr.rel (0) target = $region25
  $region24: #{double_conv.4} parent=0 // pred_region
    _
  $region25: #{double_conv.4} parent=0 // pred_fallthru
    _
  // Predicated region
  $region26: #{double_conv.4} parent=0 // pred_check
    _
  $region27: #{double_conv.4} parent=0 // pred_check_branch
    %483 = sbr.rel (0) target = $region29
  $region28: #{double_conv.4} parent=0 // pred_region
    _
  $region29: #{double_conv.4} parent=0 // pred_fallthru
    _
  // Predicated region
  $region30: #{double_conv.4} parent=0 // pred_check
    _
  $region31: #{double_conv.4} parent=0 // pred_check_branch
    %485 = sbr.rel (0) target = $region33
  $region32: #{double_conv.4} parent=0 // pred_region
    _
  $region33: #{double_conv.4} parent=0 // pred_fallthru
    _

// kernel: double_conv.5
$region0: #{double_conv.5}
  #allocation0 [shape = 'u32[]', space=smem, size = 0x4, offset = 0x4, fixed_abs, tag = 'smem constant byte address 0x4 - core index']
  #allocation1 [shape = 'u32[72,128]{1,0:T(1,128)}', space=vmem, size = 0x9000, scoped, tag = 'internal scratch']
  %s0 = inlined_call_operand.vmem [shape: bf16[2,16,128], index: 0, kind: input, shape index: {}]
  %s1 = inlined_call_operand.vmem [shape: f32[1,128], index: 1, kind: input, shape index: {}]
  %s2 = inlined_call_operand.vmem [shape: f32[1,128], index: 2, kind: input, shape index: {}]
  %s3 = inlined_call_operand.vmem [shape: f32[2,16,128], index: 3, kind: output, shape index: {}]
  %s4 = sld [smem:[#allocation0]]
  $region22: #{double_conv.5} parent=0
    _
  %s6 = ssub.s32 1, %s4
  %s7 = scalar_select 0, %s6, %s4
  // Predicated region
  $region2: #{double_conv.5} parent=0 // pred_check
    _
  $region3: #{double_conv.5} parent=0 // pred_check_branch
    %9 = sbr.rel (0) target = $region5
  $region4: #{double_conv.5} parent=0 // pred_region
    _
  $region5: #{double_conv.5} parent=0 // pred_fallthru
    _
  // Predicated region
  $region6: #{double_conv.5} parent=0 // pred_check
    _
  $region7: #{double_conv.5} parent=0 // pred_check_branch
    %11 = sbr.rel (0) target = $region9
  $region8: #{double_conv.5} parent=0 // pred_region
    _
  $region9: #{double_conv.5} parent=0 // pred_fallthru
    _
  // Predicated region
  $region10: #{double_conv.5} parent=0 // pred_check
    _
  $region11: #{double_conv.5} parent=0 // pred_check_branch
    %13 = sbr.rel (0) target = $region13
  $region12: #{double_conv.5} parent=0 // pred_region
    _
  $region13: #{double_conv.5} parent=0 // pred_fallthru
    _
  %v14 = vld [vmem:[%s0] sm:$0xf]
  %v15 = vld [vmem:[%s0 + $0x4] sm:$0xf]
  %v16 = vld [vmem:[%s0 + $0x8] sm:$0xf]
  %v17 = vld [vmem:[%s0 + $0xc] sm:$0xf]
  %v18 = vunpack.c.l.bf16 %v14
  %v19 = vunpack.c.l.bf16 %v15
  %v20 = vunpack.c.l.bf16 %v16
  %v21 = vunpack.c.l.bf16 %v17
  %v22 = vld [vmem:[%s1] sm:$0x1]
  %v24 = vperm.slane %v22, 0
  %v26 = vmul.f32 %v18, %v24
  %v27 = vmul.f32 %v19, %v24
  %v28 = vmul.f32 %v20, %v24
  %v29 = vmul.f32 %v21, %v24
  %v30 = vld [vmem:[%s2] sm:$0x1]
  %v32 = vperm.slane %v30, 0
  %v34 = vadd.f32 %v26, %v32
  %v35 = vadd.f32 %v27, %v32
  %v36 = vadd.f32 %v28, %v32
  %v37 = vadd.f32 %v29, %v32
  %v38 = vmax.f32 %v34, 0.0
  %v39 = vmax.f32 %v35, 0.0
  %v40 = vmax.f32 %v36, 0.0
  %v41 = vmax.f32 %v37, 0.0
  %42 = vst [vmem:[%s3] sm:$0xff] %v38
  %43 = vst [vmem:[%s3 + $0x8] sm:$0xff] %v39
  %44 = vst [vmem:[%s3 + $0x10] sm:$0xff] %v40
  %45 = vst [vmem:[%s3 + $0x18] sm:$0xff] %v41
  // Predicated region
  $region14: #{double_conv.5} parent=0 // pred_check
    _
  $region15: #{double_conv.5} parent=0 // pred_check_branch
    %47 = sbr.rel (0) target = $region17
  $region16: #{double_conv.5} parent=0 // pred_region
    _
  $region17: #{double_conv.5} parent=0 // pred_fallthru
    _
  // Predicated region
  $region18: #{double_conv.5} parent=0 // pred_check
    _
  $region19: #{double_conv.5} parent=0 // pred_check_branch
    %49 = sbr.rel (0) target = $region21
  $region20: #{double_conv.5} parent=0 // pred_region
    _
  $region21: #{double_conv.5} parent=0 // pred_fallthru
    _

</llo_original>
